<compile_context>
chip_gen: v5e
topology: v5e:2x2
jax: 0.10.0
libtpu: 0.0.40
codegen_flags: <defaults>
</compile_context>

<pallas_src>
import jax
import jax.numpy as jnp
from jax.experimental import pallas as pl
from jax.experimental.pallas import tpu as pltpu


def _mlp_kernel(xt_ref, w1_ref, b1_ref, w2_ref, b2_ref, w3_ref, b3_ref, ot_ref):
    # xt_ref: (4, TB)   batch on lanes, features on sublanes
    # wN_ref: (out, in) PyTorch layout, bN_ref: (out, 1)
    x = xt_ref[...]

    # Biases loaded once (no in-kernel loop -> no repeated broadcasts).
    b1 = b1_ref[...]
    b2 = b2_ref[...]
    b3 = b3_ref[...]

    # Layer 1: (8,4) @ (4,TB) + (8,1) -> ReLU
    h1 = jnp.dot(w1_ref[...], x, preferred_element_type=jnp.float32) + b1
    h1 = jnp.maximum(h1, 0.0)

    # Layer 2: (8,8) @ (8,TB) + (8,1) -> ReLU
    h2 = jnp.dot(w2_ref[...], h1, preferred_element_type=jnp.float32) + b2
    h2 = jnp.maximum(h2, 0.0)

    # Layer 3: (4,8) @ (8,TB) + (4,1)   (no activation)
    y = jnp.dot(w3_ref[...], h2, preferred_element_type=jnp.float32) + b3

    ot_ref[...] = y.astype(ot_ref.dtype)


def _round_up(n, m):
    return ((n + m - 1) // m) * m


def x_transform_pallas(x, params, *, block_b=1024):
    """x: (B, 4) float32 -> (B, 4) float32.

    params: dict with w1 (8,4), b1 (8,1), w2 (8,8), b2 (8,1), w3 (4,8), b3 (4,1)
    (PyTorch (out, in) weight layout; biases as column vectors).
    """
    B = x.shape[0]
    w1, b1 = params["w1"], params["b1"]
    w2, b2 = params["w2"], params["b2"]
    w3, b3 = params["w3"], params["b3"]

    # Batch tile on the lane axis: multiple of 128, capped at block_b.
    tb = min(block_b, _round_up(max(B, 1), 128))
    Bp = _round_up(B, tb)

    # Layout plumbing: present lane-dense slabs to the kernel.
    xt = jnp.transpose(x)                       # (4, B)
    if Bp != B:
        xt = jnp.pad(xt, ((0, 0), (0, Bp - B)))

    # Weights / biases: full-array blocks with constant index_map
    # -> VMEM-resident across all grid steps.
    def const_spec(a):
        return pl.BlockSpec(a.shape, lambda i: (0, 0))

    yt = pl.pallas_call(
        _mlp_kernel,
        out_shape=jax.ShapeDtypeStruct((4, Bp), jnp.float32),
        grid=(pl.cdiv(Bp, tb),),
        in_specs=[
            pl.BlockSpec((4, tb), lambda i: (0, i)),   # x^T batch tiles
            const_spec(w1), const_spec(b1),
            const_spec(w2), const_spec(b2),
            const_spec(w3), const_spec(b3),
        ],
        out_specs=pl.BlockSpec((4, tb), lambda i: (0, i)),
        compiler_params=pltpu.CompilerParams(
            dimension_semantics=("parallel",),         # megacore-shard batch on v7x
        ),
    )(xt, w1, b1, w2, b2, w3, b3)

    return jnp.transpose(yt[:, :B])                    # back to (B, 4)


def init_params(key):
    """Deterministic init matching torch.nn.Linear shapes.

    Weights stored PyTorch-style as (out_features, in_features); biases as
    (out_features, 1) columns so they broadcast along the lane (batch) axis
    inside the transposed-layout kernel.
    """
    ks = jax.random.split(key, 6)

    def linear(kw, kb, fan_in, fan_out):
        bound = 1.0 / jnp.sqrt(fan_in)
        w = jax.random.uniform(kw, (fan_out, fan_in), jnp.float32, -bound, bound)
        b = jax.random.uniform(kb, (fan_out, 1), jnp.float32, -bound, bound)
        return w, b

    w1, b1 = linear(ks[0], ks[1], 4, 8)
    w2, b2 = linear(ks[2], ks[3], 8, 8)
    w3, b3 = linear(ks[4], ks[5], 8, 4)
    return {"w1": w1, "b1": b1, "w2": w2, "b2": b2, "w3": w3, "b3": b3}


def x_transform_ref(x, p):
    """Pure-JAX reference (standard layout) for correctness checking."""
    h = jnp.maximum(x @ p["w1"].T + p["b1"][:, 0], 0.0)
    h = jnp.maximum(h @ p["w2"].T + p["b2"][:, 0], 0.0)
    return h @ p["w3"].T + p["b3"][:, 0]


if __name__ == "__main__":
    key = jax.random.PRNGKey(0)
    k_param, k_x = jax.random.split(key)

    params = init_params(k_param)

    # Small demo batch (non-multiple of 128 to exercise the padding path).
    B = 8
    x = jax.random.normal(k_x, (B, 4), jnp.float32)

    y = x_transform_pallas(x, params)
    y = jax.block_until_ready(y)

    y_ref = x_transform_ref(x, params)
    assert y.shape == (B, 4)
    assert jnp.allclose(y, y_ref, atol=1e-5, rtol=1e-5)

    print("KERNEL_OK")
</pallas_src>

<mosaic_0001>
module attributes {stable_mosaic.version = 11 : i64} {
  func.func @_mlp_kernel(%arg0: i32, %arg1: memref<4x128xf32, #tpu.memory_space<vmem>>, %arg2: memref<8x4xf32, #tpu.memory_space<vmem>>, %arg3: memref<8x1xf32, #tpu.memory_space<vmem>>, %arg4: memref<8x8xf32, #tpu.memory_space<vmem>>, %arg5: memref<8x1xf32, #tpu.memory_space<vmem>>, %arg6: memref<4x8xf32, #tpu.memory_space<vmem>>, %arg7: memref<4x1xf32, #tpu.memory_space<vmem>>, %arg8: memref<4x128xf32, #tpu.memory_space<vmem>>) attributes {dimension_semantics = [#tpu.dimension_semantics<parallel>], iteration_bounds = array<i64: 1>, scalar_prefetch = 0 : i64, scratch_operands = 0 : i64, tpu.core_type = #tpu.core_type<tc>, window_params = [{transform_indices = @transform_0, window_bounds = array<i64: 4, 128>}, {pipeline_mode = #tpu.pipeline_mode<synchronous>, transform_indices = @transform_1, window_bounds = array<i64: 8, 4>}, {pipeline_mode = #tpu.pipeline_mode<synchronous>, transform_indices = @transform_2, window_bounds = array<i64: 8, 1>}, {pipeline_mode = #tpu.pipeline_mode<synchronous>, transform_indices = @transform_3, window_bounds = array<i64: 8, 8>}, {pipeline_mode = #tpu.pipeline_mode<synchronous>, transform_indices = @transform_4, window_bounds = array<i64: 8, 1>}, {pipeline_mode = #tpu.pipeline_mode<synchronous>, transform_indices = @transform_5, window_bounds = array<i64: 4, 8>}, {pipeline_mode = #tpu.pipeline_mode<synchronous>, transform_indices = @transform_6, window_bounds = array<i64: 4, 1>}, {transform_indices = @transform_7, window_bounds = array<i64: 4, 128>}]} {
    %c0 = arith.constant 0 : index
    %c0_0 = arith.constant 0 : index
    %0 = vector.load %arg1[%c0, %c0_0] : memref<4x128xf32, #tpu.memory_space<vmem>>, vector<4x128xf32>
    %c0_1 = arith.constant 0 : index
    %c0_2 = arith.constant 0 : index
    %1 = vector.load %arg3[%c0_1, %c0_2] : memref<8x1xf32, #tpu.memory_space<vmem>>, vector<8x1xf32>
    %c0_3 = arith.constant 0 : index
    %c0_4 = arith.constant 0 : index
    %2 = vector.load %arg5[%c0_3, %c0_4] : memref<8x1xf32, #tpu.memory_space<vmem>>, vector<8x1xf32>
    %c0_5 = arith.constant 0 : index
    %c0_6 = arith.constant 0 : index
    %3 = vector.load %arg7[%c0_5, %c0_6] : memref<4x1xf32, #tpu.memory_space<vmem>>, vector<4x1xf32>
    %c0_7 = arith.constant 0 : index
    %c0_8 = arith.constant 0 : index
    %4 = vector.load %arg2[%c0_7, %c0_8] : memref<8x4xf32, #tpu.memory_space<vmem>>, vector<8x4xf32>
    %cst = arith.constant dense<0.000000e+00> : vector<8x128xf32>
    %5 = tpu.matmul %4, %0, %cst {dimension_numbers = #tpu.dot_dimension_numbers<[1], [0], [0], [1], [0, 0, 1, 1], [], []>} : vector<8x4xf32>, vector<4x128xf32>, vector<8x128xf32> -> vector<8x128xf32>
    %6 = vector.broadcast %1 : vector<8x1xf32> to vector<8x128xf32>
    %7 = arith.addf %5, %6 : vector<8x128xf32>
    %cst_9 = arith.constant 0.000000e+00 : f32
    %8 = vector.broadcast %cst_9 : f32 to vector<8x128xf32>
    %9 = arith.maximumf %7, %8 : vector<8x128xf32>
    %c0_10 = arith.constant 0 : index
    %c0_11 = arith.constant 0 : index
    %10 = vector.load %arg4[%c0_10, %c0_11] : memref<8x8xf32, #tpu.memory_space<vmem>>, vector<8x8xf32>
    %cst_12 = arith.constant dense<0.000000e+00> : vector<8x128xf32>
    %11 = tpu.matmul %10, %9, %cst_12 {dimension_numbers = #tpu.dot_dimension_numbers<[1], [0], [0], [1], [0, 0, 1, 1], [], []>} : vector<8x8xf32>, vector<8x128xf32>, vector<8x128xf32> -> vector<8x128xf32>
    %12 = vector.broadcast %2 : vector<8x1xf32> to vector<8x128xf32>
    %13 = arith.addf %11, %12 : vector<8x128xf32>
    %cst_13 = arith.constant 0.000000e+00 : f32
    %14 = vector.broadcast %cst_13 : f32 to vector<8x128xf32>
    %15 = arith.maximumf %13, %14 : vector<8x128xf32>
    %c0_14 = arith.constant 0 : index
    %c0_15 = arith.constant 0 : index
    %16 = vector.load %arg6[%c0_14, %c0_15] : memref<4x8xf32, #tpu.memory_space<vmem>>, vector<4x8xf32>
    %cst_16 = arith.constant dense<0.000000e+00> : vector<4x128xf32>
    %17 = tpu.matmul %16, %15, %cst_16 {dimension_numbers = #tpu.dot_dimension_numbers<[1], [0], [0], [1], [0, 0, 1, 1], [], []>} : vector<4x8xf32>, vector<8x128xf32>, vector<4x128xf32> -> vector<4x128xf32>
    %18 = vector.broadcast %3 : vector<4x1xf32> to vector<4x128xf32>
    %19 = arith.addf %17, %18 : vector<4x128xf32>
    %c0_17 = arith.constant 0 : index
    %c0_18 = arith.constant 0 : index
    %20 = vector.load %arg8[%c0_17, %c0_18] : memref<4x128xf32, #tpu.memory_space<vmem>>, vector<4x128xf32>
    tpu.vector_store %arg8[%c0_17, %c0_18], %19 {strides = array<i32>} : memref<4x128xf32, #tpu.memory_space<vmem>>, vector<4x128xf32>,
    return
  }
  func.func @transform_0(%arg0: i32) -> (i32, i32) {
    %c0_i32 = arith.constant 0 : i32
    %c0_i32_0 = arith.constant 0 : i32
    return %c0_i32, %arg0 : i32, i32
  }
  func.func @transform_1(%arg0: i32) -> (i32, i32) {
    %c0_i32 = arith.constant 0 : i32
    %c0_i32_0 = arith.constant 0 : i32
    %c0_i32_1 = arith.constant 0 : i32
    return %c0_i32, %c0_i32_0 : i32, i32
  }
  func.func @transform_2(%arg0: i32) -> (i32, i32) {
    %c0_i32 = arith.constant 0 : i32
    %c0_i32_0 = arith.constant 0 : i32
    %c0_i32_1 = arith.constant 0 : i32
    return %c0_i32, %c0_i32_0 : i32, i32
  }
  func.func @transform_3(%arg0: i32) -> (i32, i32) {
    %c0_i32 = arith.constant 0 : i32
    %c0_i32_0 = arith.constant 0 : i32
    %c0_i32_1 = arith.constant 0 : i32
    return %c0_i32, %c0_i32_0 : i32, i32
  }
  func.func @transform_4(%arg0: i32) -> (i32, i32) {
    %c0_i32 = arith.constant 0 : i32
    %c0_i32_0 = arith.constant 0 : i32
    %c0_i32_1 = arith.constant 0 : i32
    return %c0_i32, %c0_i32_0 : i32, i32
  }
  func.func @transform_5(%arg0: i32) -> (i32, i32) {
    %c0_i32 = arith.constant 0 : i32
    %c0_i32_0 = arith.constant 0 : i32
    %c0_i32_1 = arith.constant 0 : i32
    return %c0_i32, %c0_i32_0 : i32, i32
  }
  func.func @transform_6(%arg0: i32) -> (i32, i32) {
    %c0_i32 = arith.constant 0 : i32
    %c0_i32_0 = arith.constant 0 : i32
    %c0_i32_1 = arith.constant 0 : i32
    return %c0_i32, %c0_i32_0 : i32, i32
  }
  func.func @transform_7(%arg0: i32) -> (i32, i32) {
    %c0_i32 = arith.constant 0 : i32
    %c0_i32_0 = arith.constant 0 : i32
    return %c0_i32, %arg0 : i32, i32
  }
}

</mosaic_0001>

<llo_original>
// kernel: tpu_custom_call.1
$region0: #{tpu_custom_call.1}
  #allocation0 [shape = 'u32[]', space=smem, size = 0x4, offset = 0x4, fixed_abs, tag = 'smem constant byte address 0x4 - core index']
  #allocation1 [shape = 'u32[72,128]{1,0:T(1,128)}', space=vmem, size = 0x9000, scoped, tag = 'internal scratch']
  %s0 = inlined_call_operand.vmem [shape: f32[4,128], index: 0, kind: input, shape index: {}]
  %s1 = inlined_call_operand.vmem [shape: f32[8,4], index: 1, kind: input, shape index: {}]
  %s2 = inlined_call_operand.vmem [shape: f32[8,1], index: 2, kind: input, shape index: {}]
  %s3 = inlined_call_operand.vmem [shape: f32[8,8], index: 3, kind: input, shape index: {}]
  %s4 = inlined_call_operand.vmem [shape: f32[8,1], index: 4, kind: input, shape index: {}]
  %s5 = inlined_call_operand.vmem [shape: f32[4,8], index: 5, kind: input, shape index: {}]
  %s6 = inlined_call_operand.vmem [shape: f32[4,1], index: 6, kind: input, shape index: {}]
  %s7 = inlined_call_operand.hbm [shape: f32[4,128], index: 7, kind: output, shape index: {}]
  %s8 = sld [smem:[#allocation0]]
  $region38: #{tpu_custom_call.1} parent=0
    _
  %s10 = ssub.s32 1, %s8
  %s11 = scalar_select 0, %s10, %s8
  $region1: #{tpu_custom_call.1} parent=0
    #allocation2 [shape = 'u8[2048]{0}', space=vmem, size = 0x800, scoped, tag = 'output window, operand 0, single buffered']
    #allocation3 [shape = 's32[1]{0}', space=sflag, size = 0x4, scoped, tag = 'scoped memory for tpu_custom_call.1']
    %12 = vsyncpa [#allocation3], 0
    // Predicated region
    $region2: #{tpu_custom_call.1} parent=1 // pred_check
      _
    $region3: #{tpu_custom_call.1} parent=1 // pred_check_branch
      %14 = sbr.rel (0) target = $region5
    $region4: #{tpu_custom_call.1} parent=1 // pred_region
      _
    $region5: #{tpu_custom_call.1} parent=1 // pred_fallthru
      _
    // Predicated region
    $region6: #{tpu_custom_call.1} parent=1 // pred_check
      _
    $region7: #{tpu_custom_call.1} parent=1 // pred_check_branch
      %16 = sbr.rel (0) target = $region9
    $region8: #{tpu_custom_call.1} parent=1 // pred_region
      _
    $region9: #{tpu_custom_call.1} parent=1 // pred_fallthru
      _
    // Predicated region
    $region10: #{tpu_custom_call.1} parent=1 // pred_check
      _
    $region11: #{tpu_custom_call.1} parent=1 // pred_check_branch
      %18 = sbr.rel (0) target = $region13
    $region12: #{tpu_custom_call.1} parent=1 // pred_region
      _
    $region13: #{tpu_custom_call.1} parent=1 // pred_fallthru
      _
    // Predicated region
    $region14: #{tpu_custom_call.1} parent=1 // pred_check
      _
    $region15: #{tpu_custom_call.1} parent=1 // pred_check_branch
      %20 = sbr.rel (0) target = $region17
    $region16: #{tpu_custom_call.1} parent=1 // pred_region
      _
    $region17: #{tpu_custom_call.1} parent=1 // pred_fallthru
      _
    // Predicated region
    $region18: #{tpu_custom_call.1} parent=1 // pred_check
      _
    $region19: #{tpu_custom_call.1} parent=1 // pred_check_branch
      %22 = sbr.rel (0) target = $region21
    $region20: #{tpu_custom_call.1} parent=1 // pred_region
      _
    $region21: #{tpu_custom_call.1} parent=1 // pred_fallthru
      _
    // Predicated region
    $region22: #{tpu_custom_call.1} parent=1 // pred_check
      _
    $region23: #{tpu_custom_call.1} parent=1 // pred_check_branch
      %24 = sbr.rel (0) target = $region25
    $region24: #{tpu_custom_call.1} parent=1 // pred_region
      _
    $region25: #{tpu_custom_call.1} parent=1 // pred_fallthru
      _
    // Predicated region
    $region26: #{tpu_custom_call.1} parent=1 // pred_check
      _
    $region27: #{tpu_custom_call.1} parent=1 // pred_check_branch
      %26 = sbr.rel (0) target = $region29
    $region28: #{tpu_custom_call.1} parent=1 // pred_region
      _
    $region29: #{tpu_custom_call.1} parent=1 // pred_fallthru
      _
    %v27 = vld [vmem:[%s0] sm:$0xf]
    %v28 = vld [vmem:[%s2] sm:$0xff]
    %v29 = vld [vmem:[%s4] sm:$0xff]
    %v30 = vld [vmem:[%s6] sm:$0xf]
    %v31 = vld [vmem:[%s1] sm:$0xff]
    %33 = vset.pattern.permute.xlu0 0
    %34 = vperm.xlu0 %33, %v28
    %v35 = vpop.permute.xlu0 %34
    %vm37 = vcmask 31744
    %v39 = vsel %vm37, %v31, 0
    %vm41 = vcmask 1043456
    %v43 = vsel %vm41, %v27, 0
    %45 = vmatpush.msra.mxu0 0.0
    %46 = vmatpush.msra.mxu0 0.0
    %47 = vmatpush.msra.mxu0 0.0
    %48 = vmatpush.msra.mxu0 0.0
    %49 = vmatpush.msra.mxu0 0.0
    %50 = vmatpush.msra.mxu0 0.0
    %51 = vmatpush.msra.mxu0 0.0
    %52 = vmatpush.msra.mxu0 0.0
    %53 = vmatpush.msra.mxu0 0.0
    %54 = vmatpush.msra.mxu0 0.0
    %55 = vmatpush.msra.mxu0 0.0
    %56 = vmatpush.msra.mxu0 0.0
    %57 = vmatpush.msra.mxu0 0.0
    %58 = vmatpush.msra.mxu0 0.0
    %59 = vmatpush.msra.mxu0 0.0
    %60 = vmatpush.msra.mxu0 %v43
    %61 = vmatmul.f32.gmra.mxu0 %v39
    %v62 = vpop.f32.mrf.mxu0
    %v63 = vadd.f32 %v35, %v62
    %64 = vdwg.mxu0
    %v65 = vmax.f32 %v63, 0.0
    %v66 = vld [vmem:[%s3] sm:$0xff]
    %68 = vset.pattern.permute.xlu0 0
    %69 = vperm.xlu0 %68, %v29
    %v70 = vpop.permute.xlu0 %69
    %vm72 = vcmask 64512
    %v74 = vsel %vm72, %v66, 0
    %76 = vmatpush.msra.mxu0 0.0
    %77 = vmatpush.msra.mxu0 0.0
    %78 = vmatpush.msra.mxu0 0.0
    %79 = vmatpush.msra.mxu0 0.0
    %80 = vmatpush.msra.mxu0 0.0
    %81 = vmatpush.msra.mxu0 0.0
    %82 = vmatpush.msra.mxu0 0.0
    %83 = vmatpush.msra.mxu0 0.0
    %84 = vmatpush.msra.mxu0 0.0
    %85 = vmatpush.msra.mxu0 0.0
    %86 = vmatpush.msra.mxu0 0.0
    %87 = vmatpush.msra.mxu0 0.0
    %88 = vmatpush.msra.mxu0 0.0
    %89 = vmatpush.msra.mxu0 0.0
    %90 = vmatpush.msra.mxu0 0.0
    %91 = vmatpush.msra.mxu0 %v65
    %92 = vmatmul.f32.gmra.mxu0 %v74
    %v93 = vpop.f32.mrf.mxu0
    %v94 = vadd.f32 %v70, %v93
    %95 = vdwg.mxu0
    %v96 = vmax.f32 %v94, 0.0
    %v97 = vld [vmem:[%s5] sm:$0xf]
    %99 = vset.pattern.permute.xlu0 0
    %100 = vperm.xlu0 %99, %v30
    %v101 = vpop.permute.xlu0 %100
    %v104 = vsel %vm72, %v97, 0
    %106 = vmatpush.msra.mxu0 0.0
    %107 = vmatpush.msra.mxu0 0.0
    %108 = vmatpush.msra.mxu0 0.0
    %109 = vmatpush.msra.mxu0 0.0
    %110 = vmatpush.msra.mxu0 0.0
    %111 = vmatpush.msra.mxu0 0.0
    %112 = vmatpush.msra.mxu0 0.0
    %113 = vmatpush.msra.mxu0 0.0
    %114 = vmatpush.msra.mxu0 0.0
    %115 = vmatpush.msra.mxu0 0.0
    %116 = vmatpush.msra.mxu0 0.0
    %117 = vmatpush.msra.mxu0 0.0
    %118 = vmatpush.msra.mxu0 0.0
    %119 = vmatpush.msra.mxu0 0.0
    %120 = vmatpush.msra.mxu0 0.0
    %121 = vmatpush.msra.mxu0 %v96
    %122 = vmatmul.f32.gmra.mxu0 %v104
    %v123 = vpop.f32.mrf.mxu0
    %v124 = vadd.f32 %v101, %v123
    %125 = vdwg.mxu0
    %126 = vst [vmem:[#allocation2] sm:$0xf] %v124
    // Predicated region
    $region30: #{tpu_custom_call.1} parent=1 // pred_check
      _
    $region31: #{tpu_custom_call.1} parent=1 // pred_check_branch
      %128 = sbr.rel (0) target = $region33
    $region32: #{tpu_custom_call.1} parent=1 // pred_region
      %130 = vsyncadd [#allocation3], 0
      %s132 = sshll.u32 [#allocation2], 4
      %s133 = int_to_ptr.vmem [resolvable:$true] %s132
      %s134 = sshll.u32 %s7, 4
      %s135 = int_to_ptr.hbm [resolvable:$true] %s134
      %137 = dma.vmem_to_hbm [thread:$0]  %s133, 64, %s135, [#allocation3]
    $region33: #{tpu_custom_call.1} parent=1 // pred_fallthru
      _
    // Predicated region
    $region34: #{tpu_custom_call.1} parent=1 // pred_check
      _
    $region35: #{tpu_custom_call.1} parent=1 // pred_check_branch
      %139 = sbr.rel (0) target = $region37
    $region36: #{tpu_custom_call.1} parent=1 // pred_region
      %141 = dma.done [#allocation3], 64
    $region37: #{tpu_custom_call.1} parent=1 // pred_fallthru
      _
    %142 = vsyncpa [#allocation3], 1

</llo_original>
